<compile_context>
chip_gen: v7x
topology: tpu7x:2x2x1
jax: 0.10.0
libtpu: 0.0.40
codegen_flags: <defaults>
</compile_context>

<pallas_src>
import functools

import jax
import jax.numpy as jnp
from jax.experimental import pallas as pl
from jax.experimental.pallas import tpu as pltpu


def _cdiv(a, b):
    return (a + b - 1) // b


def _round_up(a, b):
    return _cdiv(a, b) * b


# --------------------------------------------------------------------------
# Kernels
# --------------------------------------------------------------------------
def _residual_kernel(x_ref, w_ref, b_ref, o_ref, *, mxu_dtype):
    """out = x + (x @ W + b), one (TM, C) row tile per grid step."""
    x = x_ref[...]
    y = jnp.dot(x.astype(mxu_dtype), w_ref[...],
                preferred_element_type=jnp.float32)          # MXU, f32 accumulate
    y = y + b_ref[...]                                        # (1, C) broadcast
    o_ref[...] = (x.astype(jnp.float32) + y).astype(o_ref.dtype)


def _residual_kernel_scaled(x_ref, w_ref, b_ref, s_ref, o_ref, *, mxu_dtype):
    """out = x + (x @ W + b) * s, s = per-row drop-path scale."""
    x = x_ref[...]
    y = jnp.dot(x.astype(mxu_dtype), w_ref[...],
                preferred_element_type=jnp.float32)
    y = (y + b_ref[...]) * s_ref[...]                         # (TM, 1) broadcast
    o_ref[...] = (x.astype(jnp.float32) + y).astype(o_ref.dtype)


# --------------------------------------------------------------------------
# Wrapper
# --------------------------------------------------------------------------
def prepare_residual_weights(w, bias, *, use_bf16_matmul=False):
    """One-time prep of the wrapped module's parameters (hoist out of the
    per-forward path).  Casting/reshaping is a no-op if already prepared."""
    w_dtype = jnp.bfloat16 if use_bf16_matmul else jnp.float32
    w_p = jnp.asarray(w, dtype=w_dtype)
    b_p = jnp.asarray(bias, dtype=jnp.float32).reshape(1, -1)
    return w_p, b_p


def _choose_tm(R, C, x_itemsize):
    """Row-tile size: multiple of 8, >=256 when R allows, VMEM-capped, and an
    even (>=2) grid-step count so v7x's two TensorCores both get work."""
    r8 = _round_up(max(R, 1), 8)
    if r8 <= 256:
        return r8  # tiny problem: single tile, nothing to shard
    # Cap so x+out double buffers stay well inside VMEM (<= ~24 MiB).
    bytes_per_row = 4 * C * x_itemsize                  # 2 bufs x (x + out)
    tm_cap = max(128, min(1024, ((24 << 20) // max(bytes_per_row, 1)) // 8 * 8))
    # Prefer a deep, even grid with tiles >= 256 rows.
    for steps in (8, 6, 4, 2):
        tm = _round_up(_cdiv(R, steps), 8)
        if 256 <= tm <= tm_cap:
            return tm
    if r8 > tm_cap:                                     # huge C: VMEM-limited
        return min(tm_cap, _round_up(_cdiv(R, 2), 8))
    return r8                                           # small R: one tile


def residual_forward(x, w, bias, *, drop=0.0, training=False, key=None,
                     use_bf16_matmul=False, block_rows=None):
    """x: (B, N, C); w: (C, C); bias: (C,).  Returns x + (x @ w + bias) * mask."""
    B, N, C = x.shape
    R = B * N
    x2 = x.reshape(R, C)                                # view, no HBM copy

    w_p, b_p = prepare_residual_weights(w, bias, use_bf16_matmul=use_bf16_matmul)
    mxu_dtype = jnp.bfloat16 if use_bf16_matmul else jnp.float32

    scaled = bool(training) and drop > 0.0
    if scaled:
        if key is None:
            raise ValueError("training=True with drop>0 requires a PRNG `key`.")
        u = jax.random.uniform(key, (B,), dtype=jnp.float32)
        s_b = (u >= drop).astype(jnp.float32) / (1.0 - drop)
        s_row = jnp.broadcast_to(s_b[:, None, None], (B, N, 1)).reshape(R, 1)

    x_itemsize = jnp.dtype(x.dtype).itemsize
    w_itemsize = jnp.dtype(w_p.dtype).itemsize

    if block_rows is not None:
        tm = min(_round_up(block_rows, 8), _round_up(R, 8))
    else:
        tm = _choose_tm(R, C, x_itemsize)
    grid = _cdiv(R, tm)

    x_spec = pl.BlockSpec((tm, C), lambda i: (i, 0))
    w_spec = pl.BlockSpec((C, C), lambda i: (0, 0))     # grid-invariant: fetched once
    b_spec = pl.BlockSpec((1, C), lambda i: (0, 0))
    o_spec = pl.BlockSpec((tm, C), lambda i: (i, 0))

    # VMEM budget: x/out double-buffered + resident W/bias (+ scale) + slack,
    # capped at 56 MiB for v7x headroom (64 MiB physical per core).
    needed = (4 * tm * C * x_itemsize                   # x + out, double-buffered
              + 2 * C * C * w_itemsize                  # W (2 buffers, DMA'd once)
              + 2 * C * 4                               # bias
              + (2 * tm * 4 if scaled else 0))          # per-row scale
    vmem_limit = min(56 << 20, max(32 << 20, needed + (4 << 20)))

    cost = pl.CostEstimate(
        flops=2 * R * C * C,
        transcendentals=0,
        bytes_accessed=(2 * R * C * x_itemsize + C * C * w_itemsize + C * 4
                        + (R * 4 if scaled else 0)),
    )
    params = pltpu.CompilerParams(
        dimension_semantics=("parallel",),              # independent row tiles
        vmem_limit_bytes=vmem_limit,
    )

    if scaled:
        kernel = functools.partial(_residual_kernel_scaled, mxu_dtype=mxu_dtype)
        in_specs = [x_spec, w_spec, b_spec, pl.BlockSpec((tm, 1), lambda i: (i, 0))]
        args = (x2, w_p, b_p, s_row)
    else:
        kernel = functools.partial(_residual_kernel, mxu_dtype=mxu_dtype)
        in_specs = [x_spec, w_spec, b_spec]
        args = (x2, w_p, b_p)

    out = pl.pallas_call(
        kernel,
        out_shape=jax.ShapeDtypeStruct((R, C), x.dtype),
        grid_spec=pl.GridSpec(grid=(grid,), in_specs=in_specs, out_specs=o_spec),
        compiler_params=params,
        cost_estimate=cost,
    )(*args)

    return out.reshape(B, N, C)


# --------------------------------------------------------------------------
# Reference + test
# --------------------------------------------------------------------------
def residual_reference(x, w, bias, scale_b):
    y = jnp.einsum("bnc,cd->bnd", x.astype(jnp.float32), w.astype(jnp.float32),
                   precision=jax.lax.Precision.HIGHEST)
    y = y + bias.astype(jnp.float32)
    return (x.astype(jnp.float32) + y * scale_b[:, None, None]).astype(x.dtype)


if __name__ == "__main__":
    B, N, C = 2, 8, 32  # batch, tokens, channels

    key = jax.random.PRNGKey(0)
    kx, kw, kb, kd = jax.random.split(key, 4)

    x = jax.random.normal(kx, (B, N, C), dtype=jnp.float32)
    w = jax.random.normal(kw, (C, C), dtype=jnp.float32) * 0.05
    bias = jax.random.normal(kb, (C,), dtype=jnp.float32) * 0.01

    # --- eval path (training=False): out = x + m(x), f32 matmul -------------
    out_eval = jax.block_until_ready(
        residual_forward(x, w, bias, drop=0.1, training=False))
    ref_eval = residual_reference(x, w, bias, jnp.ones((B,), jnp.float32))
    assert out_eval.shape == (B, N, C)
    assert jnp.allclose(out_eval, ref_eval, atol=2e-2, rtol=2e-2), (
        float(jnp.max(jnp.abs(out_eval - ref_eval))))

    # --- training path with per-sample drop-path mask -----------------------
    drop = 0.5
    out_tr = jax.block_until_ready(
        residual_forward(x, w, bias, drop=drop, training=True, key=kd))
    u = jax.random.uniform(kd, (B,), dtype=jnp.float32)
    scale_b = (u >= drop).astype(jnp.float32) / (1.0 - drop)
    ref_tr = residual_reference(x, w, bias, scale_b)
    assert jnp.allclose(out_tr, ref_tr, atol=2e-2, rtol=2e-2), (
        float(jnp.max(jnp.abs(out_tr - ref_tr))))

    # --- bf16 activation I/O + bf16 MXU operands (opt-in fast path) ---------
    x_bf = x.astype(jnp.bfloat16)
    out_bf = jax.block_until_ready(
        residual_forward(x_bf, w, bias, training=False, use_bf16_matmul=True))
    ref_bf = residual_reference(x_bf, w, bias, jnp.ones((B,), jnp.float32))
    assert out_bf.dtype == jnp.bfloat16
    assert jnp.allclose(out_bf.astype(jnp.float32), ref_bf.astype(jnp.float32),
                        atol=6e-2, rtol=3e-2), (
        float(jnp.max(jnp.abs(out_bf.astype(jnp.float32)
                              - ref_bf.astype(jnp.float32)))))

    print("KERNEL_OK")
</pallas_src>

<mosaic_0001>
module attributes {stable_mosaic.version = 11 : i64} {
  func.func @_residual_kernel(%arg0: i32, %arg1: memref<16x32xf32, #tpu.memory_space<vmem>>, %arg2: memref<32x32xf32, #tpu.memory_space<vmem>>, %arg3: memref<1x32xf32, #tpu.memory_space<vmem>>, %arg4: memref<16x32xf32, #tpu.memory_space<vmem>>) attributes {dimension_semantics = [#tpu.dimension_semantics<parallel>], iteration_bounds = array<i64: 1>, scalar_prefetch = 0 : i64, scratch_operands = 0 : i64, tpu.core_type = #tpu.core_type<tc>, window_params = [{transform_indices = @transform_0, window_bounds = array<i64: 16, 32>}, {pipeline_mode = #tpu.pipeline_mode<synchronous>, transform_indices = @transform_1, window_bounds = array<i64: 32, 32>}, {pipeline_mode = #tpu.pipeline_mode<synchronous>, transform_indices = @transform_2, window_bounds = array<i64: 1, 32>}, {transform_indices = @transform_3, window_bounds = array<i64: 16, 32>}]} {
    %c0 = arith.constant 0 : index
    %c0_0 = arith.constant 0 : index
    %0 = vector.load %arg1[%c0, %c0_0] : memref<16x32xf32, #tpu.memory_space<vmem>>, vector<16x32xf32>
    %c0_1 = arith.constant 0 : index
    %c0_2 = arith.constant 0 : index
    %1 = vector.load %arg2[%c0_1, %c0_2] : memref<32x32xf32, #tpu.memory_space<vmem>>, vector<32x32xf32>
    %cst = arith.constant dense<0.000000e+00> : vector<16x32xf32>
    %2 = tpu.matmul %0, %1, %cst {dimension_numbers = #tpu.dot_dimension_numbers<[1], [0], [0], [1], [0, 0, 1, 1], [], []>} : vector<16x32xf32>, vector<32x32xf32>, vector<16x32xf32> -> vector<16x32xf32>
    %c0_3 = arith.constant 0 : index
    %c0_4 = arith.constant 0 : index
    %3 = vector.load %arg3[%c0_3, %c0_4] : memref<1x32xf32, #tpu.memory_space<vmem>>, vector<1x32xf32>
    %4 = vector.broadcast %3 : vector<1x32xf32> to vector<16x32xf32>
    %5 = arith.addf %2, %4 : vector<16x32xf32>
    %6 = arith.addf %0, %5 : vector<16x32xf32>
    %c0_5 = arith.constant 0 : index
    %c0_6 = arith.constant 0 : index
    %7 = vector.load %arg4[%c0_5, %c0_6] : memref<16x32xf32, #tpu.memory_space<vmem>>, vector<16x32xf32>
    tpu.vector_store %arg4[%c0_5, %c0_6], %6 {strides = array<i32>} : memref<16x32xf32, #tpu.memory_space<vmem>>, vector<16x32xf32>,
    return
  }
  func.func @transform_0(%arg0: i32) -> (i32, i32) {
    %c0_i32 = arith.constant 0 : i32
    %c0_i32_0 = arith.constant 0 : i32
    return %arg0, %c0_i32 : i32, i32
  }
  func.func @transform_1(%arg0: i32) -> (i32, i32) {
    %c0_i32 = arith.constant 0 : i32
    %c0_i32_0 = arith.constant 0 : i32
    %c0_i32_1 = arith.constant 0 : i32
    return %c0_i32, %c0_i32_0 : i32, i32
  }
  func.func @transform_2(%arg0: i32) -> (i32, i32) {
    %c0_i32 = arith.constant 0 : i32
    %c0_i32_0 = arith.constant 0 : i32
    %c0_i32_1 = arith.constant 0 : i32
    return %c0_i32, %c0_i32_0 : i32, i32
  }
  func.func @transform_3(%arg0: i32) -> (i32, i32) {
    %c0_i32 = arith.constant 0 : i32
    %c0_i32_0 = arith.constant 0 : i32
    return %arg0, %c0_i32 : i32, i32
  }
}

</mosaic_0001>

<llo_original>
// kernel: tpu_custom_call.1
$region0: #{tpu_custom_call.1}
  #allocation0 [shape = 'u32[]', space=smem, size = 0x4, offset = 0x4, fixed_abs, tag = 'smem constant byte address 0x4 - core index']
  #allocation1 [shape = 'u32[144,128]{1,0:T(1,128)}', space=vmem, size = 0x12000, scoped, tag = 'internal scratch']
  %s0 = inlined_call_operand.hbm [shape: f32[16,32], index: 0, kind: input, shape index: {}]
  %s1 = inlined_call_operand.hbm [shape: f32[32,32], index: 1, kind: input, shape index: {}]
  %s2 = inlined_call_operand.vmem [shape: f32[1,32], index: 2, kind: input, shape index: {}]
  %s3 = inlined_call_operand.hbm [shape: f32[16,32], index: 3, kind: output, shape index: {}]
  %s4 = sld [smem:[#allocation0]]
  $region30: #{tpu_custom_call.1} parent=0
    _
  %s6 = ssub.s32 1, %s4
  %s7 = scalar_select 0, %s6, %s4
  $region1: #{tpu_custom_call.1} parent=0
    #allocation2 [shape = 'u8[8192]{0}', space=vmem, size = 0x2000, scoped, tag = 'input window, operand 0, single buffered']
    #allocation3 [shape = 's32[1]{0}', space=sflag, size = 0x4, scoped, tag = 'scoped memory for tpu_custom_call.1']
    #allocation4 [shape = 's32[1]{0}', space=sflag, size = 0x4, scoped, tag = 'scoped memory for tpu_custom_call.1']
    #allocation5 [shape = 'u8[16384]{0}', space=vmem, size = 0x4000, scoped, tag = 'input window, operand 1, single buffered']
    #allocation6 [shape = 's32[1]{0}', space=sflag, size = 0x4, scoped, tag = 'scoped memory for tpu_custom_call.1']
    #allocation7 [shape = 'u8[8192]{0}', space=vmem, size = 0x2000, scoped, tag = 'output window, operand 0, single buffered']
    %8 = vsyncpa [#allocation3], 0
    %9 = vsyncpa [#allocation6], 0
    %10 = vsyncpa [#allocation4], 0
    // Predicated region
    $region2: #{tpu_custom_call.1} parent=1 // pred_check
      _
    $region3: #{tpu_custom_call.1} parent=1 // pred_check_branch
      %12 = sbr.rel (0) target = $region5
    $region4: #{tpu_custom_call.1} parent=1 // pred_region
      %s14 = ssub.s32 256, 256
      %15 = vsyncadd [#allocation3], %s14
      %s16 = sshll.u32 [#allocation2], 4
      %s17 = int_to_ptr.vmem [resolvable:$true] %s16
      %22 = dma.hbm_to_vmem [thread:$0]  %s0, 256, %s17, [#allocation3], 128, 128, 8
    $region5: #{tpu_custom_call.1} parent=1 // pred_fallthru
      _
    // Predicated region
    $region6: #{tpu_custom_call.1} parent=1 // pred_check
      _
    $region7: #{tpu_custom_call.1} parent=1 // pred_check_branch
      %24 = sbr.rel (0) target = $region9
    $region8: #{tpu_custom_call.1} parent=1 // pred_region
      %s26 = ssub.s32 512, 512
      %27 = vsyncadd [#allocation6], %s26
      %s28 = sshll.u32 [#allocation5], 4
      %s29 = int_to_ptr.vmem [resolvable:$true] %s28
      %34 = dma.hbm_to_vmem [thread:$0]  %s1, 512, %s29, [#allocation6], 128, 128, 8
    $region9: #{tpu_custom_call.1} parent=1 // pred_fallthru
      _
    // Predicated region
    $region10: #{tpu_custom_call.1} parent=1 // pred_check
      _
    $region11: #{tpu_custom_call.1} parent=1 // pred_check_branch
      %36 = sbr.rel (0) target = $region13
    $region12: #{tpu_custom_call.1} parent=1 // pred_region
      _
    $region13: #{tpu_custom_call.1} parent=1 // pred_fallthru
      _
    // Predicated region
    $region14: #{tpu_custom_call.1} parent=1 // pred_check
      _
    $region15: #{tpu_custom_call.1} parent=1 // pred_check_branch
      %38 = sbr.rel (0) target = $region17
    $region16: #{tpu_custom_call.1} parent=1 // pred_region
      %39 = dma.done [#allocation3], 256
    $region17: #{tpu_custom_call.1} parent=1 // pred_fallthru
      _
    // Predicated region
    $region18: #{tpu_custom_call.1} parent=1 // pred_check
      _
    $region19: #{tpu_custom_call.1} parent=1 // pred_check_branch
      %41 = sbr.rel (0) target = $region21
    $region20: #{tpu_custom_call.1} parent=1 // pred_region
      %42 = dma.done [#allocation6], 512
    $region21: #{tpu_custom_call.1} parent=1 // pred_fallthru
      _
    %v43 = vld [vmem:[#allocation2] sm:$0xff]
    %v44 = vld [vmem:[#allocation2 + $0x8] sm:$0xff]
    %v45 = vld [vmem:[#allocation5] sm:$0xff]
    %v46 = vld [vmem:[#allocation5 + $0x8] sm:$0xff]
    %v47 = vld [vmem:[#allocation5 + $0x10] sm:$0xff]
    %v48 = vld [vmem:[#allocation5 + $0x18] sm:$0xff]
    %v49 = vld [vmem:[%s2] sm:$0x1]
    %v51 = vlaneseq
    %v52 = vshrl.u32 %v51, 7
    %v53 = vsub.s32 0, %v52
    %v54 = vrot.slane %v49, %v53
    %vm56 = vcmask 261120
    %v58 = vsel %vm56, %v43, 0
    %v61 = vsel %vm56, %v44, 0
    %63 = vmatprep.subr.mxu0 0.0
    %64 = vmatpush1.msra.mxu0 %v45
    %65 = vmatprep.subr.mxu0 0.0
    %66 = vmatpush1.msra.mxu0 %v46
    %67 = vmatprep.subr.mxu0 0.0
    %68 = vmatpush1.msra.mxu0 %v47
    %69 = vmatprep.subr.mxu0 0.0
    %70 = vmatpush1.msra.mxu0 %v48
    %71 = vmatprep.subr.mxu0 0.0
    %72 = vmatpush1.msra.mxu0 0.0
    %73 = vmatprep.subr.mxu0 0.0
    %74 = vmatpush1.msra.mxu0 0.0
    %75 = vmatprep.subr.mxu0 0.0
    %76 = vmatpush1.msra.mxu0 0.0
    %77 = vmatprep.subr.mxu0 0.0
    %78 = vmatpush1.msra.mxu0 0.0
    %79 = vmatprep.subr.mxu0 0.0
    %80 = vmatpush1.msra.mxu0 0.0
    %81 = vmatprep.subr.mxu0 0.0
    %82 = vmatpush1.msra.mxu0 0.0
    %83 = vmatprep.subr.mxu0 0.0
    %84 = vmatpush1.msra.mxu0 0.0
    %85 = vmatprep.subr.mxu0 0.0
    %86 = vmatpush1.msra.mxu0 0.0
    %87 = vmatprep.subr.mxu0 0.0
    %88 = vmatpush1.msra.mxu0 0.0
    %89 = vmatprep.subr.mxu0 0.0
    %90 = vmatpush1.msra.mxu0 0.0
    %91 = vmatprep.subr.mxu0 0.0
    %92 = vmatpush1.msra.mxu0 0.0
    %93 = vmatprep.subr.mxu0 0.0
    %94 = vmatpush1.msra.mxu0 0.0
    %95 = vmatprep.subr.mxu0 0.0
    %96 = vmatpush1.msra.mxu0 0.0
    %97 = vmatprep.subr.mxu0 0.0
    %98 = vmatpush1.msra.mxu0 0.0
    %99 = vmatprep.subr.mxu0 0.0
    %100 = vmatpush1.msra.mxu0 0.0
    %101 = vmatprep.subr.mxu0 0.0
    %102 = vmatpush1.msra.mxu0 0.0
    %103 = vmatprep.subr.mxu0 0.0
    %104 = vmatpush1.msra.mxu0 0.0
    %105 = vmatprep.subr.mxu0 0.0
    %106 = vmatpush1.msra.mxu0 0.0
    %107 = vmatprep.subr.mxu0 0.0
    %108 = vmatpush1.msra.mxu0 0.0
    %109 = vmatprep.subr.mxu0 0.0
    %110 = vmatpush1.msra.mxu0 0.0
    %111 = vmatprep.subr.mxu0 0.0
    %112 = vmatpush1.msra.mxu0 0.0
    %113 = vmatprep.subr.mxu0 0.0
    %114 = vmatpush1.msra.mxu0 0.0
    %115 = vmatprep.subr.mxu0 0.0
    %116 = vmatpush1.msra.mxu0 0.0
    %117 = vmatprep.subr.mxu0 0.0
    %118 = vmatpush1.msra.mxu0 0.0
    %119 = vmatprep.subr.mxu0 0.0
    %120 = vmatpush1.msra.mxu0 0.0
    %121 = vmatprep.subr.mxu0 0.0
    %122 = vmatpush1.msra.mxu0 0.0
    %123 = vmatprep.subr.mxu0 0.0
    %124 = vmatpush1.msra.mxu0 0.0
    %125 = vmatprep.subr.mxu0 0.0
    %126 = vmatpush1.msra.mxu0 0.0
    %127 = vmatprep.mubr.f32.mxu0 0.0
    %128 = vmatmul.mubr.f32.gmra.mrb[0].mxu0 %v58
    %v129 = vpop.f32.mrb[0].mxu0
    %v130 = vadd.f32 %v54, %v129
    %v131 = vpop.f32.mrb[0].mxu0
    %132 = vmatprep.mubr.f32.mxu0 0.0
    %133 = vmatmul.mubr.f32.gmra.mrb[0].mxu0 %v61
    %v134 = vpop.f32.mrb[0].mxu0
    %v135 = vadd.f32 %v54, %v134
    %v136 = vpop.f32.mrb[0].mxu0
    %137 = vdwg.mxu0
    %v138 = vadd.f32 %v43, %v130
    %v139 = vadd.f32 %v44, %v135
    %140 = vst.msk [vmem:[#allocation7] sm:$0xff] %vm56, %v138
    %141 = vst.msk [vmem:[#allocation7 + $0x8] sm:$0xff] %vm56, %v139
    // Predicated region
    $region22: #{tpu_custom_call.1} parent=1 // pred_check
      _
    $region23: #{tpu_custom_call.1} parent=1 // pred_check_branch
      %143 = sbr.rel (0) target = $region25
    $region24: #{tpu_custom_call.1} parent=1 // pred_region
      %s145 = ssub.s32 256, 256
      %146 = vsyncadd [#allocation4], %s145
      %s147 = sshll.u32 [#allocation7], 4
      %s148 = int_to_ptr.vmem [resolvable:$true] %s147
      %153 = dma.vmem_to_hbm [thread:$0]  %s148, 256, %s3, [#allocation4], 128, 128, 8
    $region25: #{tpu_custom_call.1} parent=1 // pred_fallthru
      _
    // Predicated region
    $region26: #{tpu_custom_call.1} parent=1 // pred_check
      _
    $region27: #{tpu_custom_call.1} parent=1 // pred_check_branch
      %155 = sbr.rel (0) target = $region29
    $region28: #{tpu_custom_call.1} parent=1 // pred_region
      %156 = dma.done [#allocation4], 256
    $region29: #{tpu_custom_call.1} parent=1 // pred_fallthru
      _
    %157 = vsyncpa [#allocation3], 1
    %158 = vsyncpa [#allocation6], 1
    %159 = vsyncpa [#allocation4], 1

</llo_original>
